<compile_context>
chip_gen: v5e
topology: v5e:2x2
jax: 0.10.0
libtpu: 0.0.40
codegen_flags: <defaults>
</compile_context>

<pallas_src>
import functools

import jax
import jax.numpy as jnp
from jax import lax
from jax.experimental import pallas as pl
from jax.experimental.pallas import tpu as pltpu


def _location_kernel(x_ref, wft_ref, o_ref, *, B, T, K, C_in, pad):
    # x_ref  : (B, C_in, T)    native NCW attention weights, time on lanes
    # wft_ref: (D, K*C_in)     fused (dense @ conv) weight, transposed
    # o_ref  : (B, D, T)       output, time on lanes (wrapper -> (B, T, D))
    wft = wft_ref[...]                                         # (D, K*C_in)

    cols = []
    for b in range(B):                                         # B is small & static
        x = x_ref[b]                                           # (C_in, T)
        if pad > 0:
            zpad = jnp.zeros((C_in, pad), dtype=x.dtype)
            x_pad = jnp.concatenate([zpad, x, zpad], axis=-1)  # (C_in, T + 2*pad)
        else:
            x_pad = x
        # im2col with static lane slices: colT[k*C_in + c, t] = x_pad[c, t + k]
        col_b = jnp.concatenate([x_pad[:, k:k + T] for k in range(K)], axis=0)
        cols.append(col_b)                                     # (K*C_in, T)

    col_all = jnp.concatenate(cols, axis=-1)                   # (K*C_in, B*T)

    # Single fused conv+dense matmul on the MXU: (D, K*C_in) @ (K*C_in, B*T)
    out_all = jnp.dot(wft, col_all, preferred_element_type=jnp.float32)  # (D, B*T)

    for b in range(B):
        o_ref[b] = out_all[:, b * T:(b + 1) * T].astype(o_ref.dtype)


def location_layer(attention_weights_cat, w_conv, w_dense):
    """attention_weights_cat: (B, 2, T) float32 (PyTorch NCW layout)
       w_conv: (F, 2, K)  Conv1d weight (out_ch, in_ch, K), bias=False
       w_dense: (D, F)    Linear weight (out, in), bias=False
       returns: (B, T, D)
    """
    B, C_in, T = attention_weights_cat.shape
    F_, C_in_w, K = w_conv.shape
    assert C_in_w == C_in
    assert K % 2 == 1, "LocationLayer 'same' padding assumes odd kernel size"
    D = w_dense.shape[0]
    pad = (K - 1) // 2

    # Fused weight: WfT[d, k*C_in + c] = sum_f w_dense[d, f] * w_conv[f, c, k]
    # (tiny precompute; removes one serialized matmul + one weight DMA in the kernel)
    wft = jnp.einsum("df,fck->dkc", w_dense, w_conv).reshape(D, K * C_in)

    kernel = functools.partial(_location_kernel, B=B, T=T, K=K, C_in=C_in, pad=pad)

    out_bdt = pl.pallas_call(
        kernel,
        out_shape=jax.ShapeDtypeStruct((B, D, T), attention_weights_cat.dtype),
        grid=(1,),  # single step: whole problem fits VMEM trivially on v5e/v6e/v7x
        in_specs=[
            pl.BlockSpec((B, C_in, T), lambda i: (0, 0, 0)),
            pl.BlockSpec((D, K * C_in), lambda i: (0, 0)),
        ],
        out_specs=pl.BlockSpec((B, D, T), lambda i: (0, 0, 0)),
        compiler_params=pltpu.CompilerParams(dimension_semantics=("arbitrary",)),
    )(attention_weights_cat, wft)

    # layout plumbing back to the module's (B, T, D)
    return jnp.transpose(out_bdt, (0, 2, 1))


def _reference(attention_weights_cat, w_conv, w_dense):
    # pure-JAX reference matching PyTorch semantics
    pad = (w_conv.shape[-1] - 1) // 2
    conv = lax.conv_general_dilated(
        attention_weights_cat, w_conv,
        window_strides=(1,), padding=[(pad, pad)],
        dimension_numbers=("NCH", "OIH", "NCH"))            # (B, F, T)
    proc = jnp.transpose(conv, (0, 2, 1))                    # (B, T, F)
    return jnp.einsum("btf,df->btd", proc, w_dense)          # (B, T, D)


if __name__ == "__main__":
    # LocationLayer(attention_n_filters=8, attention_kernel_size=5, attention_dim=16)
    B, T = 2, 16
    C_IN = 2          # fixed by the module (prev attention + cumulative attention)
    N_FILTERS = 8
    KSIZE = 5
    ATT_DIM = 16

    key = jax.random.PRNGKey(0)
    kx, kc, kd = jax.random.split(key, 3)
    x = jax.random.normal(kx, (B, C_IN, T), dtype=jnp.float32)
    # deterministic synthetic weights (no checkpoint)
    w_conv = jax.random.normal(kc, (N_FILTERS, C_IN, KSIZE), dtype=jnp.float32) * 0.3
    w_dense = jax.random.normal(kd, (ATT_DIM, N_FILTERS), dtype=jnp.float32) * 0.3

    out = location_layer(x, w_conv, w_dense)
    out = jax.block_until_ready(out)

    ref = _reference(x, w_conv, w_dense)
    assert out.shape == (B, T, ATT_DIM), out.shape
    assert jnp.allclose(out, ref, atol=1e-4, rtol=1e-4), \
        float(jnp.max(jnp.abs(out - ref)))
    print("KERNEL_OK")
</pallas_src>

<mosaic_0001>
module attributes {stable_mosaic.version = 11 : i64} {
  func.func @_location_kernel(%arg0: i32, %arg1: memref<2x2x16xf32, #tpu.memory_space<vmem>>, %arg2: memref<16x10xf32, #tpu.memory_space<vmem>>, %arg3: memref<2x16x16xf32, #tpu.memory_space<vmem>>) attributes {dimension_semantics = [#tpu.dimension_semantics<arbitrary>], iteration_bounds = array<i64: 1>, scalar_prefetch = 0 : i64, scratch_operands = 0 : i64, tpu.core_type = #tpu.core_type<tc>, window_params = [{pipeline_mode = #tpu.pipeline_mode<synchronous>, transform_indices = @transform_0, window_bounds = array<i64: 2, 2, 16>}, {pipeline_mode = #tpu.pipeline_mode<synchronous>, transform_indices = @transform_1, window_bounds = array<i64: 16, 10>}, {pipeline_mode = #tpu.pipeline_mode<synchronous>, transform_indices = @transform_2, window_bounds = array<i64: 2, 16, 16>}]} {
    %c0 = arith.constant 0 : index
    %c0_0 = arith.constant 0 : index
    %0 = vector.load %arg2[%c0, %c0_0] : memref<16x10xf32, #tpu.memory_space<vmem>>, vector<16x10xf32>
    %c0_1 = arith.constant 0 : index
    %c0_2 = arith.constant 0 : index
    %c0_3 = arith.constant 0 : index
    %1 = vector.load %arg1[%c0_1, %c0_2, %c0_3] : memref<2x2x16xf32, #tpu.memory_space<vmem>>, vector<1x2x16xf32>
    %2 = vector.shape_cast %1 : vector<1x2x16xf32> to vector<2x16xf32>
    %cst = arith.constant 0.000000e+00 : f32
    %3 = vector.broadcast %cst : f32 to vector<2x2xf32>
    %4 = tpu.concatenate %3, %2, %3 in 1 : vector<2x2xf32>, vector<2x16xf32>, vector<2x2xf32> -> vector<2x20xf32>
    %5 = vector.extract_strided_slice %4 {offsets = [0, 0], sizes = [2, 16], strides = [1, 1]} : vector<2x20xf32> to vector<2x16xf32>
    %6 = vector.extract_strided_slice %4 {offsets = [0, 1], sizes = [2, 16], strides = [1, 1]} : vector<2x20xf32> to vector<2x16xf32>
    %7 = vector.extract_strided_slice %4 {offsets = [0, 2], sizes = [2, 16], strides = [1, 1]} : vector<2x20xf32> to vector<2x16xf32>
    %8 = vector.extract_strided_slice %4 {offsets = [0, 3], sizes = [2, 16], strides = [1, 1]} : vector<2x20xf32> to vector<2x16xf32>
    %9 = vector.extract_strided_slice %4 {offsets = [0, 4], sizes = [2, 16], strides = [1, 1]} : vector<2x20xf32> to vector<2x16xf32>
    %10 = tpu.concatenate %5, %6, %7, %8, %9 in 0 : vector<2x16xf32>, vector<2x16xf32>, vector<2x16xf32>, vector<2x16xf32>, vector<2x16xf32> -> vector<10x16xf32>
    %c1 = arith.constant 1 : index
    %c0_4 = arith.constant 0 : index
    %c0_5 = arith.constant 0 : index
    %11 = vector.load %arg1[%c1, %c0_4, %c0_5] : memref<2x2x16xf32, #tpu.memory_space<vmem>>, vector<1x2x16xf32>
    %12 = vector.shape_cast %11 : vector<1x2x16xf32> to vector<2x16xf32>
    %cst_6 = arith.constant 0.000000e+00 : f32
    %13 = vector.broadcast %cst_6 : f32 to vector<2x2xf32>
    %14 = tpu.concatenate %13, %12, %13 in 1 : vector<2x2xf32>, vector<2x16xf32>, vector<2x2xf32> -> vector<2x20xf32>
    %15 = vector.extract_strided_slice %14 {offsets = [0, 0], sizes = [2, 16], strides = [1, 1]} : vector<2x20xf32> to vector<2x16xf32>
    %16 = vector.extract_strided_slice %14 {offsets = [0, 1], sizes = [2, 16], strides = [1, 1]} : vector<2x20xf32> to vector<2x16xf32>
    %17 = vector.extract_strided_slice %14 {offsets = [0, 2], sizes = [2, 16], strides = [1, 1]} : vector<2x20xf32> to vector<2x16xf32>
    %18 = vector.extract_strided_slice %14 {offsets = [0, 3], sizes = [2, 16], strides = [1, 1]} : vector<2x20xf32> to vector<2x16xf32>
    %19 = vector.extract_strided_slice %14 {offsets = [0, 4], sizes = [2, 16], strides = [1, 1]} : vector<2x20xf32> to vector<2x16xf32>
    %20 = tpu.concatenate %15, %16, %17, %18, %19 in 0 : vector<2x16xf32>, vector<2x16xf32>, vector<2x16xf32>, vector<2x16xf32>, vector<2x16xf32> -> vector<10x16xf32>
    %21 = tpu.concatenate %10, %20 in 1 : vector<10x16xf32>, vector<10x16xf32> -> vector<10x32xf32>
    %cst_7 = arith.constant dense<0.000000e+00> : vector<16x32xf32>
    %22 = tpu.matmul %0, %21, %cst_7 {dimension_numbers = #tpu.dot_dimension_numbers<[1], [0], [0], [1], [0, 0, 1, 1], [], []>} : vector<16x10xf32>, vector<10x32xf32>, vector<16x32xf32> -> vector<16x32xf32>
    %23 = vector.extract_strided_slice %22 {offsets = [0, 0], sizes = [16, 16], strides = [1, 1]} : vector<16x32xf32> to vector<16x16xf32>
    %c0_8 = arith.constant 0 : index
    %c0_9 = arith.constant 0 : index
    %c0_10 = arith.constant 0 : index
    %24 = vector.load %arg3[%c0_8, %c0_9, %c0_10] : memref<2x16x16xf32, #tpu.memory_space<vmem>>, vector<1x16x16xf32>
    %25 = vector.shape_cast %24 : vector<1x16x16xf32> to vector<16x16xf32>
    %26 = vector.shape_cast %23 : vector<16x16xf32> to vector<1x16x16xf32>
    tpu.vector_store %arg3[%c0_8, %c0_9, %c0_10], %26 {strides = array<i32>} : memref<2x16x16xf32, #tpu.memory_space<vmem>>, vector<1x16x16xf32>,
    %27 = vector.extract_strided_slice %22 {offsets = [0, 16], sizes = [16, 16], strides = [1, 1]} : vector<16x32xf32> to vector<16x16xf32>
    %c1_11 = arith.constant 1 : index
    %c0_12 = arith.constant 0 : index
    %c0_13 = arith.constant 0 : index
    %28 = vector.load %arg3[%c1_11, %c0_12, %c0_13] : memref<2x16x16xf32, #tpu.memory_space<vmem>>, vector<1x16x16xf32>
    %29 = vector.shape_cast %28 : vector<1x16x16xf32> to vector<16x16xf32>
    %30 = vector.shape_cast %27 : vector<16x16xf32> to vector<1x16x16xf32>
    tpu.vector_store %arg3[%c1_11, %c0_12, %c0_13], %30 {strides = array<i32>} : memref<2x16x16xf32, #tpu.memory_space<vmem>>, vector<1x16x16xf32>,
    return
  }
  func.func @transform_0(%arg0: i32) -> (i32, i32, i32) {
    %c0_i32 = arith.constant 0 : i32
    %c0_i32_0 = arith.constant 0 : i32
    %c0_i32_1 = arith.constant 0 : i32
    %c0_i32_2 = arith.constant 0 : i32
    return %c0_i32, %c0_i32_0, %c0_i32_1 : i32, i32, i32
  }
  func.func @transform_1(%arg0: i32) -> (i32, i32) {
    %c0_i32 = arith.constant 0 : i32
    %c0_i32_0 = arith.constant 0 : i32
    %c0_i32_1 = arith.constant 0 : i32
    return %c0_i32, %c0_i32_0 : i32, i32
  }
  func.func @transform_2(%arg0: i32) -> (i32, i32, i32) {
    %c0_i32 = arith.constant 0 : i32
    %c0_i32_0 = arith.constant 0 : i32
    %c0_i32_1 = arith.constant 0 : i32
    %c0_i32_2 = arith.constant 0 : i32
    return %c0_i32, %c0_i32_0, %c0_i32_1 : i32, i32, i32
  }
}

</mosaic_0001>

<llo_original>
// kernel: tpu_custom_call.1
$region0: #{tpu_custom_call.1}
  #allocation0 [shape = 'u32[]', space=smem, size = 0x4, offset = 0x4, fixed_abs, tag = 'smem constant byte address 0x4 - core index']
  #allocation1 [shape = 'u32[72,128]{1,0:T(1,128)}', space=vmem, size = 0x9000, scoped, tag = 'internal scratch']
  %s0 = inlined_call_operand.hbm [shape: f32[2,2,16], index: 0, kind: input, shape index: {}]
  %s1 = inlined_call_operand.hbm [shape: f32[16,10], index: 1, kind: input, shape index: {}]
  %s2 = inlined_call_operand.hbm [shape: f32[2,16,16], index: 2, kind: output, shape index: {}]
  %s3 = sld [smem:[#allocation0]]
  $region26: #{tpu_custom_call.1} parent=0
    _
  %s5 = ssub.s32 1, %s3
  %s6 = scalar_select 0, %s5, %s3
  $region1: #{tpu_custom_call.1} parent=0
    #allocation2 [shape = 'u8[2048]{0}', space=vmem, size = 0x800, scoped, tag = 'input window, operand 0, single buffered']
    #allocation3 [shape = 's32[1]{0}', space=sflag, size = 0x4, scoped, tag = 'scoped memory for tpu_custom_call.1']
    #allocation4 [shape = 's32[1]{0}', space=sflag, size = 0x4, scoped, tag = 'scoped memory for tpu_custom_call.1']
    #allocation5 [shape = 'u8[8192]{0}', space=vmem, size = 0x2000, scoped, tag = 'input window, operand 1, single buffered']
    #allocation6 [shape = 's32[1]{0}', space=sflag, size = 0x4, scoped, tag = 'scoped memory for tpu_custom_call.1']
    #allocation7 [shape = 'u8[16384]{0}', space=vmem, size = 0x4000, scoped, tag = 'output window, operand 0, single buffered']
    %7 = vsyncpa [#allocation3], 0
    %8 = vsyncpa [#allocation6], 0
    %9 = vsyncpa [#allocation4], 0
    // Predicated region
    $region2: #{tpu_custom_call.1} parent=1 // pred_check
      _
    $region3: #{tpu_custom_call.1} parent=1 // pred_check_branch
      %11 = sbr.rel (0) target = $region5
    $region4: #{tpu_custom_call.1} parent=1 // pred_region
      %13 = vsyncadd [#allocation3], 0
      %s14 = sshll.u32 %s0, 4
      %s15 = int_to_ptr.hbm [resolvable:$true] %s14
      %s16 = sshll.u32 [#allocation2], 4
      %s17 = int_to_ptr.vmem [resolvable:$true] %s16
      %22 = dma.hbm_to_vmem [thread:$0]  %s15, 64, %s17, [#allocation3], 32, 32, 2
    $region5: #{tpu_custom_call.1} parent=1 // pred_fallthru
      _
    // Predicated region
    $region6: #{tpu_custom_call.1} parent=1 // pred_check
      _
    $region7: #{tpu_custom_call.1} parent=1 // pred_check_branch
      %24 = sbr.rel (0) target = $region9
    $region8: #{tpu_custom_call.1} parent=1 // pred_region
      %26 = vsyncadd [#allocation6], 0
      %s27 = sshll.u32 %s1, 4
      %s28 = int_to_ptr.hbm [resolvable:$true] %s27
      %s29 = sshll.u32 [#allocation5], 4
      %s30 = int_to_ptr.vmem [resolvable:$true] %s29
      %35 = dma.hbm_to_vmem [thread:$0]  %s28, 256, %s30, [#allocation6], 128, 128, 8
    $region9: #{tpu_custom_call.1} parent=1 // pred_fallthru
      _
    // Predicated region
    $region10: #{tpu_custom_call.1} parent=1 // pred_check
      _
    $region11: #{tpu_custom_call.1} parent=1 // pred_check_branch
      %37 = sbr.rel (0) target = $region13
    $region12: #{tpu_custom_call.1} parent=1 // pred_region
      %39 = dma.done [#allocation3], 64
    $region13: #{tpu_custom_call.1} parent=1 // pred_fallthru
      _
    // Predicated region
    $region14: #{tpu_custom_call.1} parent=1 // pred_check
      _
    $region15: #{tpu_custom_call.1} parent=1 // pred_check_branch
      %41 = sbr.rel (0) target = $region17
    $region16: #{tpu_custom_call.1} parent=1 // pred_region
      %43 = dma.done [#allocation6], 256
    $region17: #{tpu_custom_call.1} parent=1 // pred_fallthru
      _
    %v44 = vld [vmem:[#allocation5] sm:$0xff]
    %v45 = vld [vmem:[#allocation5 + $0x8] sm:$0xff]
    %v46 = vld [vmem:[#allocation2] sm:$0x3]
    %48 = vrot.lane.b32.xlu0 %v46, 2
    %v49 = vpop.permute.xlu0 %48
    %vm51 = vcmask 15360
    %v52 = vsel %vm51, 0.0, %v49
    %vm53 = vcmask 146432
    %v54 = vsel %vm53, %v52, 0.0
    %v56 = vrot.slane %v54, 6
    %57 = vrot.lane.b32.xlu0 %v56, 127
    %v58 = vpop.permute.xlu0 %57
    %v60 = vrot.slane %v54, 4
    %61 = vrot.lane.b32.xlu0 %v60, 126
    %v62 = vpop.permute.xlu0 %61
    %v64 = vrot.slane %v54, 2
    %65 = vrot.lane.b32.xlu0 %v64, 125
    %v66 = vpop.permute.xlu0 %65
    %68 = vrot.lane.b32.xlu0 %v54, 124
    %v69 = vpop.permute.xlu0 %68
    %vm71 = vcmask 1041408
    %v72 = vsel %vm71, %v54, %v58
    %vm73 = vcmask 1043456
    %v74 = vsel %vm73, %v72, %v62
    %vm75 = vcmask 1045504
    %v76 = vsel %vm75, %v74, %v66
    %s77 = scalar_lea.vmem [#allocation2], 2
    %v78 = vld [vmem:[%s77] sm:$0x3]
    %80 = vrot.lane.b32.xlu0 %v78, 2
    %v81 = vpop.permute.xlu0 %80
    %v83 = vsel %vm51, 0.0, %v81
    %v84 = vsel %vm53, %v83, 0.0
    %v86 = vrot.slane %v84, 6
    %87 = vrot.lane.b32.xlu0 %v86, 127
    %v88 = vpop.permute.xlu0 %87
    %v90 = vrot.slane %v84, 4
    %91 = vrot.lane.b32.xlu0 %v90, 126
    %v92 = vpop.permute.xlu0 %91
    %v94 = vrot.slane %v84, 2
    %95 = vrot.lane.b32.xlu0 %v94, 125
    %v96 = vpop.permute.xlu0 %95
    %98 = vrot.lane.b32.xlu0 %v84, 124
    %v99 = vpop.permute.xlu0 %98
    %v100 = vsel %vm71, %v84, %v88
    %v101 = vsel %vm73, %v100, %v92
    %v102 = vsel %vm75, %v101, %v96
    %104 = vrot.lane.b32.xlu0 %v102, 16
    %v105 = vpop.permute.xlu0 %104
    %106 = vrot.lane.b32.xlu0 %v99, 16
    %v107 = vpop.permute.xlu0 %106
    %vm110 = vcmask 130048
    %v111 = vsel %vm110, %v76, %v105
    %v112 = vsel %vm110, %v69, %v107
    %vm113 = vcmask 80896
    %v115 = vsel %vm113, %v44, 0
    %v118 = vsel %vm113, %v45, 0
    %v121 = vsel %vm71, %v112, 0
    %123 = vmatpush.msra.mxu0 0.0
    %124 = vmatpush.msra.mxu0 0.0
    %125 = vmatpush.msra.mxu0 0.0
    %126 = vmatpush.msra.mxu0 0.0
    %127 = vmatpush.msra.mxu0 0.0
    %128 = vmatpush.msra.mxu0 0.0
    %129 = vmatpush.msra.mxu0 0.0
    %130 = vmatpush.msra.mxu0 0.0
    %131 = vmatpush.msra.mxu0 0.0
    %132 = vmatpush.msra.mxu0 0.0
    %133 = vmatpush.msra.mxu0 0.0
    %134 = vmatpush.msra.mxu0 0.0
    %135 = vmatpush.msra.mxu0 0.0
    %136 = vmatpush.msra.mxu0 0.0
    %137 = vmatpush.msra.mxu0 %v121
    %138 = vmatpush.msra.mxu0 %v111
    %139 = vmatmul.f32.gmra.mxu0 %v115
    %v140 = vpop.f32.mrf.mxu0
    %v141 = vadd.f32 0.0, %v140
    %142 = vmatmul.f32.gmra.mxu0 %v118
    %v143 = vpop.f32.mrf.mxu0
    %v144 = vadd.f32 0.0, %v143
    %145 = vdwg.mxu0
    %146 = vst.msk [vmem:[#allocation7] sm:$0xff] %vm110, %v141
    %147 = vst.msk [vmem:[#allocation7 + $0x8] sm:$0xff] %vm110, %v144
    %150 = vrot.lane.b32.xlu0 %v141, 112
    %v151 = vpop.permute.xlu0 %150
    %152 = vrot.lane.b32.xlu0 %v144, 112
    %v153 = vpop.permute.xlu0 %152
    %s156 = scalar_lea.vmem [#allocation7], 16
    %157 = vst.msk [vmem:[%s156] sm:$0xff] %vm110, %v151
    %158 = vst.msk [vmem:[%s156 + $0x8] sm:$0xff] %vm110, %v153
    // Predicated region
    $region18: #{tpu_custom_call.1} parent=1 // pred_check
      _
    $region19: #{tpu_custom_call.1} parent=1 // pred_check_branch
      %160 = sbr.rel (0) target = $region21
    $region20: #{tpu_custom_call.1} parent=1 // pred_region
      %162 = vsyncadd [#allocation4], 0
      %s163 = sshll.u32 [#allocation7], 4
      %s164 = int_to_ptr.vmem [resolvable:$true] %s163
      %s165 = sshll.u32 %s2, 4
      %s166 = int_to_ptr.hbm [resolvable:$true] %s165
      %171 = dma.vmem_to_hbm [thread:$0]  %s164, 512, %s166, [#allocation4], 128, 128, 8
    $region21: #{tpu_custom_call.1} parent=1 // pred_fallthru
      _
    // Predicated region
    $region22: #{tpu_custom_call.1} parent=1 // pred_check
      _
    $region23: #{tpu_custom_call.1} parent=1 // pred_check_branch
      %173 = sbr.rel (0) target = $region25
    $region24: #{tpu_custom_call.1} parent=1 // pred_region
      %175 = dma.done [#allocation4], 512
    $region25: #{tpu_custom_call.1} parent=1 // pred_fallthru
      _
    %176 = vsyncpa [#allocation3], 1
    %177 = vsyncpa [#allocation6], 1
    %178 = vsyncpa [#allocation4], 1

</llo_original>
